<compile_context>
chip_gen: v7x
topology: tpu7x:2x2x1
jax: 0.10.0
libtpu: 0.0.40
codegen_flags: <defaults>
</compile_context>

<pallas_src>
import jax
import jax.numpy as jnp
from jax import lax
from jax.experimental import pallas as pl
from jax.experimental.pallas import tpu as pltpu


def _round_up(x, m):
    return ((x + m - 1) // m) * m


def dan_kernel(seg_ref, tok_ref, inv_len_ref, w1_ref, b1_ref, w2_ref, b2_ref,
               out_ref, acc_ref):
    """Grid: (batch blocks 'parallel', token tiles 'arbitrary' reduction).

    seg_ref     : (1, tT)    int32  absolute bag id per token, -1 = padding
    tok_ref     : (tT, D)    bf16   gathered token embeddings for this tile
    inv_len_ref : (Bb, 1)    f32    1 / bag length (0-safe) for this batch block
    w1_ref      : (H, D)     bf16   fc weight, PyTorch (out, in) layout
    b1_ref      : (1, H)     f32
    w2_ref      : (Cp, H)    bf16   fc_2 weight (padded to Cp), PyTorch layout
    b2_ref      : (1, Cp)    f32
    out_ref     : (Bb, Cp)   f32
    acc_ref     : (Bb, D)    f32    running per-bag embedding sum (scratch)
    """
    b = pl.program_id(0)
    k = pl.program_id(1)

    @pl.when(k == 0)
    def _init():
        acc_ref[...] = jnp.zeros_like(acc_ref)

    bb = acc_ref.shape[0]
    tt = seg_ref.shape[1]

    # One-hot pooling mask built in registers (VPU work, hidden under the MXU
    # slot); fed to the MXU directly as bf16 — no (B, T) matrix touches HBM
    # and no per-tile cross-lane reduction / narrow store.
    row_ids = lax.broadcasted_iota(jnp.int32, (bb, tt), 0) + b * bb
    onehot = (seg_ref[...] == row_ids).astype(jnp.bfloat16)      # (Bb, tT)

    # Segment-sum of the bf16 token tile, accumulated in f32.
    acc_ref[...] += lax.dot_general(
        onehot, tok_ref[...],
        dimension_numbers=(((1,), (0,)), ((), ())),
        preferred_element_type=jnp.float32)                      # (Bb, D)

    @pl.when(k == pl.num_programs(1) - 1)
    def _finalize():
        # Mean pooling; empty bags (inv_len == 0 path handled in wrapper) and
        # padded rows stay exactly zero, like nn.EmbeddingBag(mode='mean').
        pooled = (acc_ref[...] * inv_len_ref[...]).astype(jnp.bfloat16)

        # fc: contract dim 1 of (Bb, D) with dim 1 of (H, D) -> (Bb, H);
        # PyTorch weight layout consumed directly, no in-kernel transpose.
        h = lax.dot_general(
            pooled, w1_ref[...],
            dimension_numbers=(((1,), (1,)), ((), ())),
            preferred_element_type=jnp.float32)
        h = jnp.maximum(h + b1_ref[...], 0.0)                    # f32 bias/ReLU

        # fc_2: contract dim 1 of (Bb, H) with dim 1 of (Cp, H) -> (Bb, Cp).
        out = lax.dot_general(
            h.astype(jnp.bfloat16), w2_ref[...],
            dimension_numbers=(((1,), (1,)), ((), ())),
            preferred_element_type=jnp.float32)
        out_ref[...] = (out + b2_ref[...]).astype(out_ref.dtype)


def dan_forward(params, text, offsets, *, t_tile=None, b_block=None,
                vmem_limit_bytes=48 * 1024 * 1024):
    """text: (T,) int32 token ids; offsets: (B,) int32 sorted bag start positions."""
    emb_table = params["embedding"]                  # bf16 table (cast at init)
    w1, b1 = params["fc_w"], params["fc_b"]
    w2, b2 = params["fc2_w"], params["fc2_b"]

    T = text.shape[0]
    B = offsets.shape[0]
    D = emb_table.shape[1]
    H = w1.shape[0]
    C = w2.shape[0]

    B_pad = max(8, _round_up(B, 8))                  # >= 8 sublanes
    C_pad = _round_up(C, 128)                        # lane-dense output stores

    # Batch blocking: default is one block (no-op on single-TC v5e/v6e); pass
    # a smaller b_block to shard the 'parallel' axis across v7x's two TCs.
    if b_block is None:
        b_block = B_pad
    b_block = max(8, _round_up(b_block, 8))
    B_pad = _round_up(B_pad, b_block)
    n_b = B_pad // b_block

    # --- token-tile sizing: big enough to amortize ~0.35 us per grid step,
    # --- small enough (with double buffering + resident weights) for VMEM.
    if t_tile is None:
        resident = (H * D * 2 + C_pad * H * 2 + H * 4 + C_pad * 4   # weights/biases (x1)
                    + b_block * D * 4                               # acc scratch
                    + 2 * b_block * C_pad * 4                       # out buffers
                    + 2 * b_block * 4)                              # inv_len
        tok_budget = max(vmem_limit_bytes // 2 - resident, 2 * 128 * D * 2)
        per_buf = min(2 * 1024 * 1024, tok_budget // 2)             # ~2 MiB / buffer
        t_tile = max(128, (per_buf // (D * 2)) // 128 * 128)
    t_tile = min(_round_up(t_tile, 128), _round_up(max(T, 1), 128))
    T_pad = _round_up(max(T, 1), t_tile)
    n_t = T_pad // t_tile

    # --- glue: pad the tiny 1-D id vectors (NOT the (T, D) activation) -------
    # Padded tokens use id 0 -> real (finite) embedding rows, but seg = -1
    # keeps them out of every bag; no uninitialized data reaches the MXU.
    text_p = jnp.pad(text.astype(jnp.int32), (0, T_pad - T))
    pos = jnp.arange(T, dtype=jnp.int32)
    seg = (jnp.searchsorted(offsets.astype(jnp.int32), pos, side="right")
           .astype(jnp.int32) - 1)
    seg = jnp.pad(seg, (0, T_pad - T), constant_values=-1).reshape(1, T_pad)

    # bf16 gather (table already bf16), streamed straight into the kernel.
    tok = emb_table[text_p]                                         # (T_pad, D) bf16

    # Bag lengths straight from offsets (EmbeddingBag semantics: bag i is
    # text[offsets[i]:offsets[i+1]], last bag runs to T); empty bag -> 0 output.
    bag_end = jnp.concatenate([offsets[1:].astype(jnp.int32),
                               jnp.array([T], dtype=jnp.int32)])
    lens = (bag_end - offsets.astype(jnp.int32)).astype(jnp.float32)
    inv_len = jnp.where(lens > 0, 1.0 / jnp.maximum(lens, 1.0), 0.0)
    inv_len = jnp.pad(inv_len, (0, B_pad - B)).reshape(B_pad, 1)

    # Weights kept in PyTorch (out, in) layout; kernel contracts dim 1 of both.
    w1b = w1.astype(jnp.bfloat16)                                   # (H, D)
    w2b = jnp.pad(w2, ((0, C_pad - C), (0, 0))).astype(jnp.bfloat16)  # (Cp, H)
    b1r = b1.reshape(1, H).astype(jnp.float32)
    b2r = jnp.pad(b2, (0, C_pad - C)).reshape(1, C_pad).astype(jnp.float32)

    invariant = dict(pipeline_mode=pl.Buffered(1))    # single-buffer constants

    out = pl.pallas_call(
        dan_kernel,
        out_shape=jax.ShapeDtypeStruct((B_pad, C_pad), jnp.float32),
        grid_spec=pltpu.PrefetchScalarGridSpec(
            num_scalar_prefetch=0,
            grid=(n_b, n_t),
            in_specs=[
                pl.BlockSpec((1, t_tile), lambda b, k: (0, k)),      # seg ids
                pl.BlockSpec((t_tile, D), lambda b, k: (k, 0)),      # token tile
                pl.BlockSpec((b_block, 1), lambda b, k: (b, 0)),     # 1/len
                pl.BlockSpec((H, D), lambda b, k: (0, 0), **invariant),      # fc W
                pl.BlockSpec((1, H), lambda b, k: (0, 0), **invariant),      # fc b
                pl.BlockSpec((C_pad, H), lambda b, k: (0, 0), **invariant),  # fc_2 W
                pl.BlockSpec((1, C_pad), lambda b, k: (0, 0), **invariant),  # fc_2 b
            ],
            out_specs=pl.BlockSpec((b_block, C_pad), lambda b, k: (b, 0)),
            scratch_shapes=[
                pltpu.VMEM((b_block, D), jnp.float32),               # pooled-sum acc
            ],
        ),
        compiler_params=pltpu.CompilerParams(
            # batch blocks independent (megacore on v7x); T is a reduction.
            dimension_semantics=("parallel", "arbitrary"),
            # 48 MiB: < v7x's 64 MiB physical per TC, raises v5e's 16 MiB default.
            vmem_limit_bytes=vmem_limit_bytes,
        ),
    )(seg, tok, inv_len, w1b, b1r, w2b, b2r)

    return out[:B, :C]


def init_params(key, vocab_size, embed_dim, hidden_dim, num_class):
    initrange = 0.5
    k1, k2, k3 = jax.random.split(key, 3)
    return {
        # Table stored in bf16 so the XLA gather reads half the bytes; the
        # dense fc weights are tiny and are cast per-call in the wrapper.
        "embedding": jax.random.uniform(
            k1, (vocab_size, embed_dim), jnp.float32,
            -initrange, initrange).astype(jnp.bfloat16),
        "fc_w": jax.random.uniform(
            k2, (hidden_dim, embed_dim), jnp.float32, -initrange, initrange),
        "fc_b": jnp.zeros((hidden_dim,), jnp.float32),
        "fc2_w": jax.random.uniform(
            k3, (num_class, hidden_dim), jnp.float32, -initrange, initrange),
        "fc2_b": jnp.zeros((num_class,), jnp.float32),
    }


def reference_forward(params, text, offsets):
    """Pure-JAX f32 reference matching nn.EmbeddingBag(mode='mean')+fc/relu/fc_2."""
    tok_emb = params["embedding"].astype(jnp.float32)[text]
    T = text.shape[0]
    B = offsets.shape[0]
    pos = jnp.arange(T, dtype=jnp.int32)
    seg = jnp.searchsorted(offsets.astype(jnp.int32), pos, side="right") - 1
    onehot = (seg[None, :] == jnp.arange(B, dtype=jnp.int32)[:, None]).astype(jnp.float32)
    lens = jnp.maximum(onehot.sum(axis=1, keepdims=True), 1.0)
    pooled = (onehot / lens) @ tok_emb
    h = jnp.maximum(pooled @ params["fc_w"].T + params["fc_b"], 0.0)
    return h @ params["fc2_w"].T + params["fc2_b"]


if __name__ == "__main__":
    vocab_size, embed_dim, hidden_dim, num_class = 100, 32, 64, 8
    B, T = 4, 160  # 4 bags over 160 total tokens

    key = jax.random.PRNGKey(0)
    pkey, tkey = jax.random.split(key)
    params = init_params(pkey, vocab_size, embed_dim, hidden_dim, num_class)

    text = jax.random.randint(tkey, (T,), 0, vocab_size, dtype=jnp.int32)
    offsets = jnp.array([0, 37, 81, 120], dtype=jnp.int32)  # bag start positions

    out = dan_forward(params, text, offsets)
    out = jax.block_until_ready(out)

    ref = reference_forward(params, text, offsets)
    assert out.shape == (B, num_class)
    # bf16 table/streaming operands with f32 accumulation -> small, intentional
    # rounding vs the f32 reference.
    assert jnp.allclose(out, ref, atol=3e-2, rtol=3e-2), (out, ref)

    print("KERNEL_OK")
</pallas_src>

<mosaic_0001>
module attributes {stable_mosaic.version = 11 : i64} {
  func.func @dan_kernel(%arg0: i32, %arg1: i32, %arg2: memref<1x256xi32, #tpu.memory_space<vmem>>, %arg3: memref<256x32xbf16, #tpu.memory_space<vmem>>, %arg4: memref<8x1xf32, #tpu.memory_space<vmem>>, %arg5: memref<64x32xbf16, #tpu.memory_space<vmem>>, %arg6: memref<1x64xf32, #tpu.memory_space<vmem>>, %arg7: memref<128x64xbf16, #tpu.memory_space<vmem>>, %arg8: memref<1x128xf32, #tpu.memory_space<vmem>>, %arg9: memref<8x128xf32, #tpu.memory_space<vmem>>, %arg10: memref<8x32xf32, #tpu.memory_space<vmem>>) attributes {dimension_semantics = [#tpu.dimension_semantics<parallel>, #tpu.dimension_semantics<arbitrary>], iteration_bounds = array<i64: 1, 1>, scalar_prefetch = 0 : i64, scratch_operands = 1 : i64, tpu.core_type = #tpu.core_type<tc>, window_params = [{transform_indices = @transform_0, window_bounds = array<i64: 1, 256>}, {transform_indices = @transform_1, window_bounds = array<i64: 256, 32>}, {transform_indices = @transform_2, window_bounds = array<i64: 8, 1>}, {pipeline_mode = #tpu.pipeline_mode<synchronous>, transform_indices = @transform_3, window_bounds = array<i64: 64, 32>}, {pipeline_mode = #tpu.pipeline_mode<synchronous>, transform_indices = @transform_4, window_bounds = array<i64: 1, 64>}, {pipeline_mode = #tpu.pipeline_mode<synchronous>, transform_indices = @transform_5, window_bounds = array<i64: 128, 64>}, {pipeline_mode = #tpu.pipeline_mode<synchronous>, transform_indices = @transform_6, window_bounds = array<i64: 1, 128>}, {transform_indices = @transform_7, window_bounds = array<i64: 8, 128>}]} {
    %c0_i32 = arith.constant 0 : i32
    %0 = arith.cmpi eq, %arg1, %c0_i32 : i32
    %1 = arith.extui %0 : i1 to i32
    %c0_i32_0 = arith.constant 0 : i32
    %2 = arith.cmpi ne, %1, %c0_i32_0 : i32
    scf.if %2 {
      %cst_10 = arith.constant 0.000000e+00 : f32
      %21 = vector.broadcast %cst_10 : f32 to vector<8x32xf32>
      %c0_11 = arith.constant 0 : index
      %c0_12 = arith.constant 0 : index
      %22 = vector.load %arg10[%c0_11, %c0_12] : memref<8x32xf32, #tpu.memory_space<vmem>>, vector<8x32xf32>
      tpu.vector_store %arg10[%c0_11, %c0_12], %21 {strides = array<i32>} : memref<8x32xf32, #tpu.memory_space<vmem>>, vector<8x32xf32>,
    } else {
    }
    %3 = tpu.iota {dimensions = array<i32: 0>} : vector<8x256xi32>
    %c8_i32 = arith.constant 8 : i32
    %4 = arith.muli %arg0, %c8_i32 : i32
    %5 = vector.broadcast %4 : i32 to vector<8x256xi32>
    %6 = arith.addi %3, %5 : vector<8x256xi32>
    %c0 = arith.constant 0 : index
    %c0_1 = arith.constant 0 : index
    %7 = vector.load %arg2[%c0, %c0_1] : memref<1x256xi32, #tpu.memory_space<vmem>>, vector<1x256xi32>
    %8 = vector.broadcast %7 : vector<1x256xi32> to vector<8x256xi32>
    %9 = arith.cmpi eq, %8, %6 : vector<8x256xi32>
    %10 = arith.extui %9 : vector<8x256xi1> to vector<8x256xi32>
    %11 = arith.sitofp %10 : vector<8x256xi32> to vector<8x256xf32>
    %12 = arith.truncf %11 : vector<8x256xf32> to vector<8x256xbf16>
    %c0_2 = arith.constant 0 : index
    %c0_3 = arith.constant 0 : index
    %13 = vector.load %arg10[%c0_2, %c0_3] : memref<8x32xf32, #tpu.memory_space<vmem>>, vector<8x32xf32>
    %c0_4 = arith.constant 0 : index
    %c0_5 = arith.constant 0 : index
    %14 = vector.load %arg3[%c0_4, %c0_5] : memref<256x32xbf16, #tpu.memory_space<vmem>>, vector<256x32xbf16>
    %cst = arith.constant dense<0.000000e+00> : vector<8x32xf32>
    %15 = tpu.matmul %12, %14, %cst {dimension_numbers = #tpu.dot_dimension_numbers<[1], [0], [0], [1], [0, 0, 1, 1], [], []>} : vector<8x256xbf16>, vector<256x32xbf16>, vector<8x32xf32> -> vector<8x32xf32>
    %16 = arith.addf %13, %15 : vector<8x32xf32>
    %c0_6 = arith.constant 0 : index
    %c0_7 = arith.constant 0 : index
    %17 = vector.load %arg10[%c0_6, %c0_7] : memref<8x32xf32, #tpu.memory_space<vmem>>, vector<8x32xf32>
    tpu.vector_store %arg10[%c0_6, %c0_7], %16 {strides = array<i32>} : memref<8x32xf32, #tpu.memory_space<vmem>>, vector<8x32xf32>,
    %c0_i32_8 = arith.constant 0 : i32
    %18 = arith.cmpi eq, %arg1, %c0_i32_8 : i32
    %19 = arith.extui %18 : i1 to i32
    %c0_i32_9 = arith.constant 0 : i32
    %20 = arith.cmpi ne, %19, %c0_i32_9 : i32
    scf.if %20 {
      %c0_10 = arith.constant 0 : index
      %c0_11 = arith.constant 0 : index
      %21 = vector.load %arg10[%c0_10, %c0_11] : memref<8x32xf32, #tpu.memory_space<vmem>>, vector<8x32xf32>
      %c0_12 = arith.constant 0 : index
      %c0_13 = arith.constant 0 : index
      %22 = vector.load %arg4[%c0_12, %c0_13] : memref<8x1xf32, #tpu.memory_space<vmem>>, vector<8x1xf32>
      %23 = vector.broadcast %22 : vector<8x1xf32> to vector<8x32xf32>
      %24 = arith.mulf %21, %23 : vector<8x32xf32>
      %25 = arith.truncf %24 : vector<8x32xf32> to vector<8x32xbf16>
      %c0_14 = arith.constant 0 : index
      %c0_15 = arith.constant 0 : index
      %26 = vector.load %arg5[%c0_14, %c0_15] : memref<64x32xbf16, #tpu.memory_space<vmem>>, vector<64x32xbf16>
      %cst_16 = arith.constant dense<0.000000e+00> : vector<8x64xf32>
      %27 = tpu.matmul %25, %26, %cst_16 {dimension_numbers = #tpu.dot_dimension_numbers<[1], [1], [0], [0], [0, 0, 1, 0], [], []>} : vector<8x32xbf16>, vector<64x32xbf16>, vector<8x64xf32> -> vector<8x64xf32>
      %c0_17 = arith.constant 0 : index
      %c0_18 = arith.constant 0 : index
      %28 = vector.load %arg6[%c0_17, %c0_18] : memref<1x64xf32, #tpu.memory_space<vmem>>, vector<1x64xf32>
      %29 = vector.broadcast %28 : vector<1x64xf32> to vector<8x64xf32>
      %30 = arith.addf %27, %29 : vector<8x64xf32>
      %cst_19 = arith.constant 0.000000e+00 : f32
      %31 = vector.broadcast %cst_19 : f32 to vector<8x64xf32>
      %32 = arith.maximumf %30, %31 : vector<8x64xf32>
      %33 = arith.truncf %32 : vector<8x64xf32> to vector<8x64xbf16>
      %c0_20 = arith.constant 0 : index
      %c0_21 = arith.constant 0 : index
      %34 = vector.load %arg7[%c0_20, %c0_21] : memref<128x64xbf16, #tpu.memory_space<vmem>>, vector<128x64xbf16>
      %cst_22 = arith.constant dense<0.000000e+00> : vector<8x128xf32>
      %35 = tpu.matmul %33, %34, %cst_22 {dimension_numbers = #tpu.dot_dimension_numbers<[1], [1], [0], [0], [0, 0, 1, 0], [], []>} : vector<8x64xbf16>, vector<128x64xbf16>, vector<8x128xf32> -> vector<8x128xf32>
      %c0_23 = arith.constant 0 : index
      %c0_24 = arith.constant 0 : index
      %36 = vector.load %arg8[%c0_23, %c0_24] : memref<1x128xf32, #tpu.memory_space<vmem>>, vector<1x128xf32>
      %37 = vector.broadcast %36 : vector<1x128xf32> to vector<8x128xf32>
      %38 = arith.addf %35, %37 : vector<8x128xf32>
      %c0_25 = arith.constant 0 : index
      %c0_26 = arith.constant 0 : index
      %39 = vector.load %arg9[%c0_25, %c0_26] : memref<8x128xf32, #tpu.memory_space<vmem>>, vector<8x128xf32>
      tpu.vector_store %arg9[%c0_25, %c0_26], %38 {strides = array<i32>} : memref<8x128xf32, #tpu.memory_space<vmem>>, vector<8x128xf32>,
    } else {
    }
    return
  }
  func.func @transform_0(%arg0: i32, %arg1: i32) -> (i32, i32) {
    %c0_i32 = arith.constant 0 : i32
    %c0_i32_0 = arith.constant 0 : i32
    return %c0_i32, %arg1 : i32, i32
  }
  func.func @transform_1(%arg0: i32, %arg1: i32) -> (i32, i32) {
    %c0_i32 = arith.constant 0 : i32
    %c0_i32_0 = arith.constant 0 : i32
    return %arg1, %c0_i32 : i32, i32
  }
  func.func @transform_2(%arg0: i32, %arg1: i32) -> (i32, i32) {
    %c0_i32 = arith.constant 0 : i32
    %c0_i32_0 = arith.constant 0 : i32
    return %arg0, %c0_i32 : i32, i32
  }
  func.func @transform_3(%arg0: i32, %arg1: i32) -> (i32, i32) {
    %c0_i32 = arith.constant 0 : i32
    %c0_i32_0 = arith.constant 0 : i32
    %c0_i32_1 = arith.constant 0 : i32
    return %c0_i32, %c0_i32_0 : i32, i32
  }
  func.func @transform_4(%arg0: i32, %arg1: i32) -> (i32, i32) {
    %c0_i32 = arith.constant 0 : i32
    %c0_i32_0 = arith.constant 0 : i32
    %c0_i32_1 = arith.constant 0 : i32
    return %c0_i32, %c0_i32_0 : i32, i32
  }
  func.func @transform_5(%arg0: i32, %arg1: i32) -> (i32, i32) {
    %c0_i32 = arith.constant 0 : i32
    %c0_i32_0 = arith.constant 0 : i32
    %c0_i32_1 = arith.constant 0 : i32
    return %c0_i32, %c0_i32_0 : i32, i32
  }
  func.func @transform_6(%arg0: i32, %arg1: i32) -> (i32, i32) {
    %c0_i32 = arith.constant 0 : i32
    %c0_i32_0 = arith.constant 0 : i32
    %c0_i32_1 = arith.constant 0 : i32
    return %c0_i32, %c0_i32_0 : i32, i32
  }
  func.func @transform_7(%arg0: i32, %arg1: i32) -> (i32, i32) {
    %c0_i32 = arith.constant 0 : i32
    %c0_i32_0 = arith.constant 0 : i32
    return %arg0, %c0_i32 : i32, i32
  }
}

</mosaic_0001>

<llo_original>
// kernel: tpu_custom_call.1
$region0: #{tpu_custom_call.1}
  #allocation0 [shape = 'u32[]', space=smem, size = 0x4, offset = 0x4, fixed_abs, tag = 'smem constant byte address 0x4 - core index']
  #allocation1 [shape = 'u32[144,128]{1,0:T(1,128)}', space=vmem, size = 0x12000, scoped, tag = 'internal scratch']
  #allocation2 [shape = 'f32[8,32]{1,0:T(8,128)}', space=vmem, size = 0x1000, scoped, tag = 'scratch operand']
  %s0 = inlined_call_operand.vmem [shape: s32[1,256], index: 0, kind: input, shape index: {}]
  %s1 = inlined_call_operand.vmem [shape: bf16[256,32], index: 1, kind: input, shape index: {}]
  %s2 = inlined_call_operand.vmem [shape: f32[8,1], index: 2, kind: input, shape index: {}]
  %s3 = inlined_call_operand.vmem [shape: bf16[64,32], index: 3, kind: input, shape index: {}]
  %s4 = inlined_call_operand.vmem [shape: f32[1,64], index: 4, kind: input, shape index: {}]
  %s5 = inlined_call_operand.vmem [shape: bf16[128,64], index: 5, kind: input, shape index: {}]
  %s6 = inlined_call_operand.vmem [shape: f32[1,128], index: 6, kind: input, shape index: {}]
  %s7 = inlined_call_operand.hbm [shape: f32[8,128], index: 7, kind: output, shape index: {}]
  %s8 = sld [smem:[#allocation0]]
  $region46: #{tpu_custom_call.1} parent=0
    _
  %s10 = ssub.s32 1, %s8
  %s11 = scalar_select 0, %s10, %s8
  $region1: #{tpu_custom_call.1} parent=0
    #allocation3 [shape = 'u8[4096]{0}', space=vmem, size = 0x1000, scoped, tag = 'output window, operand 0, single buffered']
    #allocation4 [shape = 's32[1]{0}', space=sflag, size = 0x4, scoped, tag = 'scoped memory for tpu_custom_call.1']
    %12 = vsyncpa [#allocation4], 0
    // Predicated region
    $region2: #{tpu_custom_call.1} parent=1 // pred_check
      _
    $region3: #{tpu_custom_call.1} parent=1 // pred_check_branch
      %14 = sbr.rel (0) target = $region5
    $region4: #{tpu_custom_call.1} parent=1 // pred_region
      _
    $region5: #{tpu_custom_call.1} parent=1 // pred_fallthru
      _
    // Predicated region
    $region6: #{tpu_custom_call.1} parent=1 // pred_check
      _
    $region7: #{tpu_custom_call.1} parent=1 // pred_check_branch
      %16 = sbr.rel (0) target = $region9
    $region8: #{tpu_custom_call.1} parent=1 // pred_region
      _
    $region9: #{tpu_custom_call.1} parent=1 // pred_fallthru
      _
    // Predicated region
    $region10: #{tpu_custom_call.1} parent=1 // pred_check
      _
    $region11: #{tpu_custom_call.1} parent=1 // pred_check_branch
      %18 = sbr.rel (0) target = $region13
    $region12: #{tpu_custom_call.1} parent=1 // pred_region
      _
    $region13: #{tpu_custom_call.1} parent=1 // pred_fallthru
      _
    // Predicated region
    $region14: #{tpu_custom_call.1} parent=1 // pred_check
      _
    $region15: #{tpu_custom_call.1} parent=1 // pred_check_branch
      %20 = sbr.rel (0) target = $region17
    $region16: #{tpu_custom_call.1} parent=1 // pred_region
      _
    $region17: #{tpu_custom_call.1} parent=1 // pred_fallthru
      _
    // Predicated region
    $region18: #{tpu_custom_call.1} parent=1 // pred_check
      _
    $region19: #{tpu_custom_call.1} parent=1 // pred_check_branch
      %22 = sbr.rel (0) target = $region21
    $region20: #{tpu_custom_call.1} parent=1 // pred_region
      _
    $region21: #{tpu_custom_call.1} parent=1 // pred_fallthru
      _
    // Predicated region
    $region22: #{tpu_custom_call.1} parent=1 // pred_check
      _
    $region23: #{tpu_custom_call.1} parent=1 // pred_check_branch
      %24 = sbr.rel (0) target = $region25
    $region24: #{tpu_custom_call.1} parent=1 // pred_region
      _
    $region25: #{tpu_custom_call.1} parent=1 // pred_fallthru
      _
    // Predicated region
    $region26: #{tpu_custom_call.1} parent=1 // pred_check
      _
    $region27: #{tpu_custom_call.1} parent=1 // pred_check_branch
      %26 = sbr.rel (0) target = $region29
    $region28: #{tpu_custom_call.1} parent=1 // pred_region
      _
    $region29: #{tpu_custom_call.1} parent=1 // pred_fallthru
      _
    %p28 = scmp.eq.s32.totalorder 0, 0
    // Predicated region
    $region30: #{tpu_custom_call.1} parent=1 // pred_check
      %p29 = pneg %p28
    $region31: #{tpu_custom_call.1} parent=1 // pred_check_branch
      %31 = sbr.rel (%p29) target = $region33
    $region32: #{tpu_custom_call.1} parent=1 // pred_region
      %vm32 = vcmask 261120
      %33 = vst.msk [vmem:[#allocation2] sm:$0xff] %vm32, 0.0
    $region33: #{tpu_custom_call.1} parent=1 // pred_fallthru
      _
    %v34 = vlaneseq
    %v35 = vshrl.u32 %v34, 7
    %s36 = smul.u32 0, 8
    %v37 = vstv %s36
    %v38 = vadd.s32 %v35, %v37
    %v39 = vld [vmem:[%s0] sm:$0x3]
    %v40 = vlaneseq
    %v41 = vshrl.u32 %v40, 7
    %v42 = vsub.s32 0, %v41
    %v43 = vrot.slane %v39, %v42
    %v44 = vlaneseq
    %v45 = vshrl.u32 %v44, 7
    %v46 = vsub.s32 1, %v45
    %v47 = vrot.slane %v39, %v46
    %vm48 = vcmp.eq.s32.totalorder %v43, %v38
    %vm49 = vcmp.eq.s32.totalorder %v47, %v38
    %v50 = vsel %vm48, 1, 0
    %v51 = vsel %vm49, 1, 0
    %v52 = vcvt.s32.f32 %v50
    %v53 = vcvt.s32.f32 %v51
    %v54 = vpack.c.bf16 %v52, %v52
    %v55 = vpack.c.bf16 %v53, %v53
    %v56 = vld [vmem:[#allocation2] sm:$0xff]
    %v57 = vld [vmem:[%s1] sm:$0xf]
    %v58 = vld [vmem:[%s1 + $0x4] sm:$0xf]
    %v59 = vld [vmem:[%s1 + $0x8] sm:$0xf]
    %v60 = vld [vmem:[%s1 + $0xc] sm:$0xf]
    %v61 = vld [vmem:[%s1 + $0x10] sm:$0xf]
    %v62 = vld [vmem:[%s1 + $0x14] sm:$0xf]
    %v63 = vld [vmem:[%s1 + $0x18] sm:$0xf]
    %v64 = vld [vmem:[%s1 + $0x1c] sm:$0xf]
    %v65 = vld [vmem:[%s1 + $0x20] sm:$0xf]
    %v66 = vld [vmem:[%s1 + $0x24] sm:$0xf]
    %v67 = vld [vmem:[%s1 + $0x28] sm:$0xf]
    %v68 = vld [vmem:[%s1 + $0x2c] sm:$0xf]
    %v69 = vld [vmem:[%s1 + $0x30] sm:$0xf]
    %v70 = vld [vmem:[%s1 + $0x34] sm:$0xf]
    %v71 = vld [vmem:[%s1 + $0x38] sm:$0xf]
    %v72 = vld [vmem:[%s1 + $0x3c] sm:$0xf]
    %v73 = vld [vmem:[%s1 + $0x40] sm:$0xf]
    %v74 = vld [vmem:[%s1 + $0x44] sm:$0xf]
    %v75 = vld [vmem:[%s1 + $0x48] sm:$0xf]
    %v76 = vld [vmem:[%s1 + $0x4c] sm:$0xf]
    %v77 = vld [vmem:[%s1 + $0x50] sm:$0xf]
    %v78 = vld [vmem:[%s1 + $0x54] sm:$0xf]
    %v79 = vld [vmem:[%s1 + $0x58] sm:$0xf]
    %v80 = vld [vmem:[%s1 + $0x5c] sm:$0xf]
    %v81 = vld [vmem:[%s1 + $0x60] sm:$0xf]
    %v82 = vld [vmem:[%s1 + $0x64] sm:$0xf]
    %v83 = vld [vmem:[%s1 + $0x68] sm:$0xf]
    %v84 = vld [vmem:[%s1 + $0x6c] sm:$0xf]
    %v85 = vld [vmem:[%s1 + $0x70] sm:$0xf]
    %v86 = vld [vmem:[%s1 + $0x74] sm:$0xf]
    %v87 = vld [vmem:[%s1 + $0x78] sm:$0xf]
    %v88 = vld [vmem:[%s1 + $0x7c] sm:$0xf]
    %v121 = vunpack.c.l.b16 %v57
    %v122 = vunpack.c.l.b16 %v58
    %v123 = vunpack.c.l.b16 %v59
    %v124 = vunpack.c.l.b16 %v60
    %v125 = vunpack.c.l.b16 %v61
    %v126 = vunpack.c.l.b16 %v62
    %v127 = vunpack.c.l.b16 %v63
    %v128 = vunpack.c.l.b16 %v64
    %v129 = vunpack.c.l.b16 %v65
    %v130 = vunpack.c.l.b16 %v66
    %v131 = vunpack.c.l.b16 %v67
    %v132 = vunpack.c.l.b16 %v68
    %v133 = vunpack.c.l.b16 %v69
    %v134 = vunpack.c.l.b16 %v70
    %v135 = vunpack.c.l.b16 %v71
    %v136 = vunpack.c.l.b16 %v72
    %v137 = vunpack.c.l.b16 %v73
    %v138 = vunpack.c.l.b16 %v74
    %v139 = vunpack.c.l.b16 %v75
    %v140 = vunpack.c.l.b16 %v76
    %v141 = vunpack.c.l.b16 %v77
    %v142 = vunpack.c.l.b16 %v78
    %v143 = vunpack.c.l.b16 %v79
    %v144 = vunpack.c.l.b16 %v80
    %v145 = vunpack.c.l.b16 %v81
    %v146 = vunpack.c.l.b16 %v82
    %v147 = vunpack.c.l.b16 %v83
    %v148 = vunpack.c.l.b16 %v84
    %v149 = vunpack.c.l.b16 %v85
    %v150 = vunpack.c.l.b16 %v86
    %v151 = vunpack.c.l.b16 %v87
    %v152 = vunpack.c.l.b16 %v88
    %v153 = vpack.c.b16 %v122, %v121
    %v154 = vpack.c.b16 %v124, %v123
    %v155 = vpack.c.b16 %v126, %v125
    %v156 = vpack.c.b16 %v128, %v127
    %v157 = vpack.c.b16 %v130, %v129
    %v158 = vpack.c.b16 %v132, %v131
    %v159 = vpack.c.b16 %v134, %v133
    %v160 = vpack.c.b16 %v136, %v135
    %v161 = vpack.c.b16 %v138, %v137
    %v162 = vpack.c.b16 %v140, %v139
    %v163 = vpack.c.b16 %v142, %v141
    %v164 = vpack.c.b16 %v144, %v143
    %v165 = vpack.c.b16 %v146, %v145
    %v166 = vpack.c.b16 %v148, %v147
    %v167 = vpack.c.b16 %v150, %v149
    %v168 = vpack.c.b16 %v152, %v151
    %185 = vmatprep.subr.bf16.mxu0 0
    %186 = vmatpush1.bf16.msra.mxu0 %v153
    %187 = vmatprep.subr.bf16.mxu0 0
    %188 = vmatpush1.bf16.msra.mxu0 %v154
    %189 = vmatprep.subr.bf16.mxu0 0
    %190 = vmatpush1.bf16.msra.mxu0 %v155
    %191 = vmatprep.subr.bf16.mxu0 0
    %192 = vmatpush1.bf16.msra.mxu0 %v156
    %193 = vmatprep.subr.bf16.mxu0 0
    %194 = vmatpush1.bf16.msra.mxu0 %v157
    %195 = vmatprep.subr.bf16.mxu0 0
    %196 = vmatpush1.bf16.msra.mxu0 %v158
    %197 = vmatprep.subr.bf16.mxu0 0
    %198 = vmatpush1.bf16.msra.mxu0 %v159
    %199 = vmatprep.subr.bf16.mxu0 0
    %200 = vmatpush1.bf16.msra.mxu0 %v160
    %201 = vmatprep.subr.bf16.mxu0 0
    %202 = vmatpush1.bf16.msra.mxu0 %v161
    %203 = vmatprep.subr.bf16.mxu0 0
    %204 = vmatpush1.bf16.msra.mxu0 %v162
    %205 = vmatprep.subr.bf16.mxu0 0
    %206 = vmatpush1.bf16.msra.mxu0 %v163
    %207 = vmatprep.subr.bf16.mxu0 0
    %208 = vmatpush1.bf16.msra.mxu0 %v164
    %209 = vmatprep.subr.bf16.mxu0 0
    %210 = vmatpush1.bf16.msra.mxu0 %v165
    %211 = vmatprep.subr.bf16.mxu0 0
    %212 = vmatpush1.bf16.msra.mxu0 %v166
    %213 = vmatprep.subr.bf16.mxu0 0
    %214 = vmatpush1.bf16.msra.mxu0 %v167
    %215 = vmatprep.subr.bf16.mxu0 0
    %216 = vmatpush1.bf16.msra.mxu0 %v168
    %217 = vmatprep.mubr.bf16.mxu0 %v55
    %218 = vmatmul.mubr.bf16.gmra.mrb[0].mxu0 %v54
    %v219 = vpop.f32.mrb[0].mxu0
    %v220 = vadd.f32 0.0, %v219
    %v221 = vpop.f32.mrb[0].mxu0
    %v222 = vpop.f32.mrb[0].mxu0
    %v223 = vpop.f32.mrb[0].mxu0
    %224 = vdwg.mxu0
    %v225 = vadd.f32 %v56, %v220
    %vm226 = vcmask 261120
    %227 = vst.msk [vmem:[#allocation2] sm:$0xff] %vm226, %v225
    // Predicated region
    $region34: #{tpu_custom_call.1} parent=1 // pred_check
      %p228 = pneg %p28
    $region35: #{tpu_custom_call.1} parent=1 // pred_check_branch
      %230 = sbr.rel (%p228) target = $region37
    $region36: #{tpu_custom_call.1} parent=1 // pred_region
      %v231 = vld [vmem:[#allocation2] sm:$0xff]
      %v232 = vld [vmem:[%s2] sm:$0xff]
      %234 = vset.pattern.permute.xlu0 0
      %235 = vperm.xlu0 %234, %v232
      %v236 = vpop.permute.xlu0 %235
      %v238 = vmul.f32 %v231, %v236
      %v239 = vpack.c.bf16 %v238, %v238
      %v240 = vld [vmem:[%s3] sm:$0xf]
      %v241 = vld [vmem:[%s3 + $0x4] sm:$0xf]
      %v242 = vld [vmem:[%s3 + $0x8] sm:$0xf]
      %v243 = vld [vmem:[%s3 + $0xc] sm:$0xf]
      %v244 = vld [vmem:[%s3 + $0x10] sm:$0xf]
      %v245 = vld [vmem:[%s3 + $0x14] sm:$0xf]
      %v246 = vld [vmem:[%s3 + $0x18] sm:$0xf]
      %v247 = vld [vmem:[%s3 + $0x1c] sm:$0xf]
      %v248 = vld [vmem:[%s4] sm:$0x1]
      %v250 = vlaneseq
      %v251 = vshrl.u32 %v250, 7
      %v252 = vsub.s32 0, %v251
      %v253 = vrot.slane %v248, %v252
      %v263 = vunpack.c.l.b16 %v240
      %v264 = vunpack.c.l.b16 %v241
      %v265 = vunpack.c.l.b16 %v242
      %v266 = vunpack.c.l.b16 %v243
      %v267 = vunpack.c.l.b16 %v244
      %v268 = vunpack.c.l.b16 %v245
      %v269 = vunpack.c.l.b16 %v246
      %v270 = vunpack.c.l.b16 %v247
      %v271 = vpack.c.b16 %v264, %v263
      %v272 = vpack.c.b16 %v266, %v265
      %v273 = vpack.c.b16 %v268, %v267
      %v274 = vpack.c.b16 %v270, %v269
      %v276 = vsel %vm226, %v239, 0
      %v279 = vsel %vm226, %v271, 0
      %v282 = vsel %vm226, %v272, 0
      %v285 = vsel %vm226, %v273, 0
      %v288 = vsel %vm226, %v274, 0
      %290 = vmatprep.subr.bf16.mxu0 0
      %291 = vmatpush1.bf16.xpose.msra.mxu0 %v279
      %292 = vmatprep.subr.bf16.mxu0 0
      %293 = vmatpush1.bf16.xpose.msra.mxu0 %v282
      %294 = vmatprep.subr.bf16.mxu0 0
      %295 = vmatpush1.bf16.xpose.msra.mxu0 %v285
      %296 = vmatprep.subr.bf16.mxu0 0
      %297 = vmatpush1.bf16.xpose.msra.mxu0 %v288
      %298 = vmatprep.subr.bf16.mxu0 0
      %299 = vmatpush1.bf16.xpose.msra.mxu0 0
      %300 = vmatprep.subr.bf16.mxu0 0
      %301 = vmatpush1.bf16.xpose.msra.mxu0 0
      %302 = vmatprep.subr.bf16.mxu0 0
      %303 = vmatpush1.bf16.xpose.msra.mxu0 0
      %304 = vmatprep.subr.bf16.mxu0 0
      %305 = vmatpush1.bf16.xpose.msra.mxu0 0
      %306 = vmatprep.subr.bf16.mxu0 0
      %307 = vmatpush1.bf16.xpose.msra.mxu0 0
      %308 = vmatprep.subr.bf16.mxu0 0
      %309 = vmatpush1.bf16.xpose.msra.mxu0 0
      %310 = vmatprep.subr.bf16.mxu0 0
      %311 = vmatpush1.bf16.xpose.msra.mxu0 0
      %312 = vmatprep.subr.bf16.mxu0 0
      %313 = vmatpush1.bf16.xpose.msra.mxu0 0
      %314 = vmatprep.subr.bf16.mxu0 0
      %315 = vmatpush1.bf16.xpose.msra.mxu0 0
      %316 = vmatprep.subr.bf16.mxu0 0
      %317 = vmatpush1.bf16.xpose.msra.mxu0 0
      %318 = vmatprep.subr.bf16.mxu0 0
      %319 = vmatpush1.bf16.xpose.msra.mxu0 0
      %320 = vmatprep.subr.bf16.mxu0 0
      %321 = vmatpush1.bf16.xpose.msra.mxu0 0
      %322 = vmatprep.mubr.bf16.mxu0 0
      %323 = vmatmul.mubr.bf16.gmra.mrb[0].mxu0 %v276
      %v324 = vpop.f32.mrb[0].mxu0
      %v325 = vadd.f32 %v253, %v324
      %v326 = vpop.f32.mrb[0].mxu0
      %v327 = vpop.f32.mrb[0].mxu0
      %v328 = vpop.f32.mrb[0].mxu0
      %329 = vdwg.mxu0
      %v330 = vmax.f32 %v325, 0.0
      %v331 = vpack.c.bf16 %v330, %v330
      %v332 = vld [vmem:[%s5] sm:$0xf]
      %v333 = vld [vmem:[%s5 + $0x4] sm:$0xf]
      %v334 = vld [vmem:[%s5 + $0x8] sm:$0xf]
      %v335 = vld [vmem:[%s5 + $0xc] sm:$0xf]
      %v336 = vld [vmem:[%s5 + $0x10] sm:$0xf]
      %v337 = vld [vmem:[%s5 + $0x14] sm:$0xf]
      %v338 = vld [vmem:[%s5 + $0x18] sm:$0xf]
      %v339 = vld [vmem:[%s5 + $0x1c] sm:$0xf]
      %v340 = vld [vmem:[%s5 + $0x20] sm:$0xf]
      %v341 = vld [vmem:[%s5 + $0x24] sm:$0xf]
      %v342 = vld [vmem:[%s5 + $0x28] sm:$0xf]
      %v343 = vld [vmem:[%s5 + $0x2c] sm:$0xf]
      %v344 = vld [vmem:[%s5 + $0x30] sm:$0xf]
      %v345 = vld [vmem:[%s5 + $0x34] sm:$0xf]
      %v346 = vld [vmem:[%s5 + $0x38] sm:$0xf]
      %v347 = vld [vmem:[%s5 + $0x3c] sm:$0xf]
      %v348 = vld [vmem:[%s6] sm:$0x1]
      %v350 = vlaneseq
      %v351 = vshrl.u32 %v350, 7
      %v352 = vsub.s32 0, %v351
      %v353 = vrot.slane %v348, %v352
      %v371 = vunpack.c.l.b16 %v332
      %v372 = vunpack.c.l.b16 %v333
      %v373 = vunpack.c.l.b16 %v334
      %v374 = vunpack.c.l.b16 %v335
      %v375 = vunpack.c.l.b16 %v336
      %v376 = vunpack.c.l.b16 %v337
      %v377 = vunpack.c.l.b16 %v338
      %v378 = vunpack.c.l.b16 %v339
      %v379 = vunpack.c.l.b16 %v340
      %v380 = vunpack.c.l.b16 %v341
      %v381 = vunpack.c.l.b16 %v342
      %v382 = vunpack.c.l.b16 %v343
      %v383 = vunpack.c.l.b16 %v344
      %v384 = vunpack.c.l.b16 %v345
      %v385 = vunpack.c.l.b16 %v346
      %v386 = vunpack.c.l.b16 %v347
      %v387 = vpack.c.b16 %v372, %v371
      %v388 = vpack.c.b16 %v374, %v373
      %v389 = vpack.c.b16 %v376, %v375
      %v390 = vpack.c.b16 %v378, %v377
      %v391 = vpack.c.b16 %v380, %v379
      %v392 = vpack.c.b16 %v382, %v381
      %v393 = vpack.c.b16 %v384, %v383
      %v394 = vpack.c.b16 %v386, %v385
      %vm395 = vcmask 523264
      %v397 = vsel %vm395, %v331, 0
      %v400 = vsel %vm395, %v387, 0
      %v403 = vsel %vm395, %v388, 0
      %v406 = vsel %vm395, %v389, 0
      %v409 = vsel %vm395, %v390, 0
      %v412 = vsel %vm395, %v391, 0
      %v415 = vsel %vm395, %v392, 0
      %v418 = vsel %vm395, %v393, 0
      %v421 = vsel %vm395, %v394, 0
      %423 = vmatprep.subr.bf16.mxu0 0
      %424 = vmatpush1.bf16.xpose.msra.mxu0 %v400
      %425 = vmatprep.subr.bf16.mxu0 0
      %426 = vmatpush1.bf16.xpose.msra.mxu0 %v403
      %427 = vmatprep.subr.bf16.mxu0 0
      %428 = vmatpush1.bf16.xpose.msra.mxu0 %v406
      %429 = vmatprep.subr.bf16.mxu0 0
      %430 = vmatpush1.bf16.xpose.msra.mxu0 %v409
      %431 = vmatprep.subr.bf16.mxu0 0
      %432 = vmatpush1.bf16.xpose.msra.mxu0 %v412
      %433 = vmatprep.subr.bf16.mxu0 0
      %434 = vmatpush1.bf16.xpose.msra.mxu0 %v415
      %435 = vmatprep.subr.bf16.mxu0 0
      %436 = vmatpush1.bf16.xpose.msra.mxu0 %v418
      %437 = vmatprep.subr.bf16.mxu0 0
      %438 = vmatpush1.bf16.xpose.msra.mxu0 %v421
      %439 = vmatprep.subr.bf16.mxu0 0
      %440 = vmatpush1.bf16.xpose.msra.mxu0 0
      %441 = vmatprep.subr.bf16.mxu0 0
      %442 = vmatpush1.bf16.xpose.msra.mxu0 0
      %443 = vmatprep.subr.bf16.mxu0 0
      %444 = vmatpush1.bf16.xpose.msra.mxu0 0
      %445 = vmatprep.subr.bf16.mxu0 0
      %446 = vmatpush1.bf16.xpose.msra.mxu0 0
      %447 = vmatprep.subr.bf16.mxu0 0
      %448 = vmatpush1.bf16.xpose.msra.mxu0 0
      %449 = vmatprep.subr.bf16.mxu0 0
      %450 = vmatpush1.bf16.xpose.msra.mxu0 0
      %451 = vmatprep.subr.bf16.mxu0 0
      %452 = vmatpush1.bf16.xpose.msra.mxu0 0
      %453 = vmatprep.subr.bf16.mxu0 0
      %454 = vmatpush1.bf16.xpose.msra.mxu0 0
      %455 = vmatprep.mubr.bf16.mxu0 0
      %456 = vmatmul.mubr.bf16.gmra.mrb[0].mxu0 %v397
      %v457 = vpop.f32.mrb[0].mxu0
      %v458 = vadd.f32 %v353, %v457
      %v459 = vpop.f32.mrb[0].mxu0
      %v460 = vpop.f32.mrb[0].mxu0
      %v461 = vpop.f32.mrb[0].mxu0
      %462 = vdwg.mxu0
      %463 = vst [vmem:[#allocation3] sm:$0xff] %v458
    $region37: #{tpu_custom_call.1} parent=1 // pred_fallthru
      _
    // Predicated region
    $region38: #{tpu_custom_call.1} parent=1 // pred_check
      _
    $region39: #{tpu_custom_call.1} parent=1 // pred_check_branch
      %465 = sbr.rel (0) target = $region41
    $region40: #{tpu_custom_call.1} parent=1 // pred_region
      %s467 = ssub.s32 128, 128
      %468 = vsyncadd [#allocation4], %s467
      %s470 = sshll.u32 [#allocation3], 4
      %s471 = int_to_ptr.vmem [resolvable:$true] %s470
      %473 = dma.vmem_to_hbm [thread:$0]  %s471, 128, %s7, [#allocation4]
    $region41: #{tpu_custom_call.1} parent=1 // pred_fallthru
      _
    // Predicated region
    $region42: #{tpu_custom_call.1} parent=1 // pred_check
      _
    $region43: #{tpu_custom_call.1} parent=1 // pred_check_branch
      %475 = sbr.rel (0) target = $region45
    $region44: #{tpu_custom_call.1} parent=1 // pred_region
      %476 = dma.done [#allocation4], 128
    $region45: #{tpu_custom_call.1} parent=1 // pred_fallthru
      _
    %477 = vsyncpa [#allocation4], 1

</llo_original>
